<compile_context>
chip_gen: v7x
topology: tpu7x:2x2x1
jax: 0.10.0
libtpu: 0.0.40
codegen_flags: <defaults>
</compile_context>

<pallas_src>
from functools import partial

import jax
import jax.numpy as jnp
from jax import lax
from jax.experimental import pallas as pl
from jax.experimental.pallas import tpu as pltpu


# --------------------------------------------------------------------------
# Kernel
# --------------------------------------------------------------------------
def _basic_block_kernel(H, W, c, x_ref, mask_ref, p_ref, out_ref):
    """Fused BasicBlock on one (Nb, C, H*W) batch block.

    x_ref    : (Nb, C, HW)  VMEM  -- NCHW batch block, HW flattened on lanes.
    mask_ref : (9, HW)      VMEM  -- per-tap destination validity masks (0/1).
    p_ref    : (c, 2c+11)   SMEM  -- packed params:
                 cols [0:c)=w1 (BN1 folded), [c:2c)=w3 (BN3 folded),
                 [2c:2c+9)=dw taps (BN2 scale folded), 2c+9=b1, 2c+10=b3'.
    out_ref  : (Nb, C, HW)  VMEM  -- final, already channel-shuffled output.
    """
    HW = H * W

    # Scalar parameter accessors (SMEM scalar reads).
    def w1(o, i):
        return p_ref[o, i]

    def w3(o, i):
        return p_ref[o, c + i]

    def wdw(j, k):
        return p_ref[j, 2 * c + k]

    def b1(o):
        return p_ref[o, 2 * c + 9]

    def b3(o):
        return p_ref[o, 2 * c + 10]

    # Hoisted per-tap boundary masks, (1, HW) each (broadcast over sublanes).
    tap_mask = {}
    for dy in (-1, 0, 1):
        for dx in (-1, 0, 1):
            if dy == 0 and dx == 0:
                continue
            k = (dy + 1) * 3 + (dx + 1)
            tap_mask[k] = mask_ref[k:k + 1, :]

    # ---- split: branch operates on channels [c:2c) -----------------------
    # Each per-channel tile is (Nb, HW): batch on sublanes, spatial on lanes.
    x2 = [x_ref[:, c + j, :] for j in range(c)]

    # ---- conv1 (1x1, BN1 scale folded) + bias + ReLU ----------------------
    h = []
    for o in range(c):
        acc = x2[0] * w1(o, 0)
        for i in range(1, c):
            acc = acc + x2[i] * w1(o, i)
        h.append(jnp.maximum(acc + b1(o), 0.0))

    # ---- conv2: 3x3 depthwise (BN2 scale folded), padding=1 ---------------
    # Neighbours are lane rolls of the per-image flattened spatial axis; taps
    # that fall outside the image (incl. roll wrap-around) are zeroed by the
    # precomputed destination masks.  BN2's bias is folded into b3' (no ReLU
    # between bn2 and conv3, and conv3 is linear).
    g = []
    for j in range(c):
        acc = h[j] * wdw(j, 4)                       # centre tap: no shift/mask
        for dy in (-1, 0, 1):
            for dx in (-1, 0, 1):
                if dy == 0 and dx == 0:
                    continue
                off = dy * W + dx                    # want v[m] = h[m + off]
                k = (dy + 1) * 3 + (dx + 1)
                v = pltpu.roll(h[j], shift=(-off) % HW, axis=1)
                acc = acc + v * tap_mask[k] * wdw(j, k)
        g.append(acc)

    # ---- conv3 (1x1, BN3 scale + BN2 bias folded) + ReLU, shuffled store --
    # ShuffleBlock(groups=2) mapping: x1 channel j -> out channel 2j,
    # branch channel j -> out channel 2j+1.
    for o in range(c):
        acc = g[0] * w3(o, 0)
        for i in range(1, c):
            acc = acc + g[i] * w3(o, i)
        y = jnp.maximum(acc + b3(o), 0.0)
        out_ref[:, 2 * o, :] = x_ref[:, o, :]        # x1 pass-through
        out_ref[:, 2 * o + 1, :] = y                 # branch


# --------------------------------------------------------------------------
# Tiling / VMEM planning (generation-aware)
# --------------------------------------------------------------------------
def _vmem_plan():
    """(activation-block VMEM budget, vmem_limit_bytes) per TPU generation."""
    try:
        kind = jax.devices()[0].device_kind.lower()
    except Exception:  # pragma: no cover - defensive
        kind = ""
    if "v5" in kind:            # v5e: smallest default scoped VMEM, lowest HBM BW
        return 8 << 20, 16 << 20
    if "v7" in kind or "7x" in kind:   # v7x: 64 MiB physical per TC -> conservative
        return 12 << 20, 32 << 20
    return 24 << 20, 64 << 20   # v6e (and default): 128 MiB physical VMEM


def _pick_batch_block(N, C, HW, vmem_budget_bytes, dtype_bytes=4):
    """Pick the batch block Nb (a divisor of N).

    Preference order:
      1. fits the VMEM budget (in + out blocks, double-buffered),
      2. leaves >= 2 grid steps (pipelining; v7x dual-TC 'parallel' sharding),
      3. multiple of 8 (full sublane occupancy) -- or all of N if N < 8,
      4. as large as possible (amortize ~0.35us/step pipeline overhead).
    """
    per_batch = 2 * 2 * C * HW * dtype_bytes        # (in + out) x double-buffer
    cap = max(1, vmem_budget_bytes // max(per_batch, 1))
    divisors = [d for d in range(1, N + 1) if N % d == 0 and d <= cap] or [1]

    def score(d):
        return (N // d >= 2, d % 8 == 0 or d == N, d)

    return max(divisors, key=score)


# --------------------------------------------------------------------------
# Wrapper
# --------------------------------------------------------------------------
def basic_block_forward(x, params):
    """x: (N, C, H, W) float32 (PyTorch NCHW). split_ratio=0.5, shuffle groups=2."""
    N, C, H, W = x.shape
    c = C // 2
    HW = H * W
    (w1, s1, b1, wdw, s2, b2, w3, s3, b3) = params

    # Fold eval-mode BN scales into the conv weights; fold BN2's bias through
    # conv3:  w3f @ (dw + b2) + b3 == w3f @ dw + (w3f @ b2 + b3).
    w1f = (w1 * s1[:, None]).astype(jnp.float32)                   # (c, c)
    w3f = (w3 * s3[:, None]).astype(jnp.float32)                   # (c, c)
    wdwf = (wdw[:, 0] * s2[:, None, None]).reshape(c, 9).astype(jnp.float32)
    b3f = (w3f @ b2 + b3).astype(jnp.float32)                      # (c,)

    packed = jnp.concatenate(
        [w1f, w3f, wdwf,
         b1.reshape(c, 1).astype(jnp.float32),
         b3f.reshape(c, 1)], axis=1)                               # (c, 2c+11)

    # Precompute destination-side validity masks for the 9 depthwise taps
    # (row k = tap (dy, dx) with k = (dy+1)*3 + (dx+1)); computed once, not
    # per grid step.
    ys, xs = jnp.divmod(jnp.arange(HW, dtype=jnp.int32), W)
    rows = []
    for dy in (-1, 0, 1):
        for dx in (-1, 0, 1):
            ok = ((ys + dy >= 0) & (ys + dy < H) &
                  (xs + dx >= 0) & (xs + dx < W))
            rows.append(ok)
    masks = jnp.stack(rows, axis=0).astype(jnp.float32)            # (9, HW)

    # Free view: NCHW -> (N, C, HW); no HBM pass.
    x3 = x.reshape(N, C, HW).astype(jnp.float32)

    budget, vmem_limit = _vmem_plan()
    Nb = _pick_batch_block(N, C, HW, budget)
    grid = (N // Nb,)

    out3 = pl.pallas_call(
        partial(_basic_block_kernel, H, W, c),
        out_shape=jax.ShapeDtypeStruct((N, C, HW), jnp.float32),
        grid=grid,
        in_specs=[
            pl.BlockSpec((Nb, C, HW), lambda n: (n, 0, 0)),        # activations
            pl.BlockSpec((9, HW), lambda n: (0, 0)),               # tap masks
            pl.BlockSpec(memory_space=pltpu.MemorySpace.SMEM),     # packed params
        ],
        out_specs=pl.BlockSpec((Nb, C, HW), lambda n: (n, 0, 0)),
        compiler_params=pltpu.CompilerParams(
            dimension_semantics=("parallel",),
            vmem_limit_bytes=vmem_limit),
    )(x3, masks, packed)

    # Output is already concatenated + channel-shuffled; just restore NCHW.
    return out3.reshape(N, C, H, W)


# --------------------------------------------------------------------------
# Synthetic params + pure-JAX reference
# --------------------------------------------------------------------------
def init_params(key, c, eps=1e-5):
    """Deterministic synthetic parameters (PyTorch weight shapes, eval-mode BN)."""
    ks = jax.random.split(key, 4)
    w1 = 0.4 * jax.random.normal(ks[0], (c, c), jnp.float32)         # conv1 (out,in)
    wdw = 0.4 * jax.random.normal(ks[1], (c, 1, 3, 3), jnp.float32)  # depthwise conv2
    w3 = 0.4 * jax.random.normal(ks[2], (c, c), jnp.float32)         # conv3 (out,in)

    def bn(kg, kb, km, kv):
        gamma = 1.0 + 0.1 * jax.random.normal(kg, (c,), jnp.float32)
        beta = 0.1 * jax.random.normal(kb, (c,), jnp.float32)
        mean = 0.1 * jax.random.normal(km, (c,), jnp.float32)
        var = jax.random.uniform(kv, (c,), jnp.float32, minval=0.5, maxval=1.5)
        scale = gamma / jnp.sqrt(var + eps)
        bias = beta - mean * scale
        return scale, bias

    kbn = jax.random.split(ks[3], 12)
    s1, b1 = bn(*kbn[0:4])
    s2, b2 = bn(*kbn[4:8])
    s3, b3 = bn(*kbn[8:12])
    return (w1, s1, b1, wdw, s2, b2, w3, s3, b3)


def reference_forward(x, params):
    """Pure-JAX reference mirroring the PyTorch module (eval-mode BN)."""
    (w1, s1, b1, wdw, s2, b2, w3, s3, b3) = params
    N, C, H, W = x.shape
    c = C // 2
    x1, x2 = x[:, :c], x[:, c:]
    dn = ('NCHW', 'OIHW', 'NCHW')
    hi = lax.Precision.HIGHEST

    o = lax.conv_general_dilated(x2, w1.reshape(c, c, 1, 1), (1, 1), 'VALID',
                                 dimension_numbers=dn, precision=hi)
    o = jnp.maximum(o * s1[None, :, None, None] + b1[None, :, None, None], 0.0)
    o = lax.conv_general_dilated(o, wdw, (1, 1), ((1, 1), (1, 1)),
                                 dimension_numbers=dn, feature_group_count=c,
                                 precision=hi)
    o = o * s2[None, :, None, None] + b2[None, :, None, None]
    o = lax.conv_general_dilated(o, w3.reshape(c, c, 1, 1), (1, 1), 'VALID',
                                 dimension_numbers=dn, precision=hi)
    o = jnp.maximum(o * s3[None, :, None, None] + b3[None, :, None, None], 0.0)

    out = jnp.concatenate([x1, o], axis=1)
    g = 2
    return out.reshape(N, g, C // g, H, W).transpose(0, 2, 1, 3, 4).reshape(N, C, H, W)


if __name__ == "__main__":
    key = jax.random.PRNGKey(0)
    kx, kp = jax.random.split(key)

    # PyTorch NCHW convention: (N=2, C=4, H=16, W=16)
    x = jax.random.normal(kx, (2, 4, 16, 16), jnp.float32)
    params = init_params(kp, c=2)   # in_channels after split = 4 * 0.5 = 2

    out = basic_block_forward(x, params)
    out = jax.block_until_ready(out)

    ref = reference_forward(x, params)
    assert out.shape == x.shape, (out.shape, x.shape)
    max_err = float(jnp.max(jnp.abs(out - ref)))
    assert jnp.allclose(out, ref, atol=1e-4, rtol=1e-4), f"max_err={max_err}"

    print("KERNEL_OK")
</pallas_src>

<mosaic_0001>
module attributes {stable_mosaic.version = 11 : i64} {
  func.func @_basic_block_kernel(%arg0: i32, %arg1: memref<1x4x256xf32, #tpu.memory_space<vmem>>, %arg2: memref<9x256xf32, #tpu.memory_space<vmem>>, %arg3: memref<2x15xf32, #tpu.memory_space<smem>>, %arg4: memref<1x4x256xf32, #tpu.memory_space<vmem>>) attributes {dimension_semantics = [#tpu.dimension_semantics<parallel>], iteration_bounds = array<i64: 2>, scalar_prefetch = 0 : i64, scratch_operands = 0 : i64, tpu.core_type = #tpu.core_type<tc>, window_params = [{transform_indices = @transform_0, window_bounds = array<i64: 1, 4, 256>}, {pipeline_mode = #tpu.pipeline_mode<synchronous>, transform_indices = @transform_1, window_bounds = array<i64: 9, 256>}, {transform_indices = @transform_2, window_bounds = array<i64: 2, 15>}, {transform_indices = @transform_3, window_bounds = array<i64: 1, 4, 256>}]} {
    %c0 = arith.constant 0 : index
    %c0_0 = arith.constant 0 : index
    %0 = vector.load %arg2[%c0, %c0_0] : memref<9x256xf32, #tpu.memory_space<vmem>>, vector<1x256xf32>
    %c1 = arith.constant 1 : index
    %c0_1 = arith.constant 0 : index
    %1 = vector.load %arg2[%c1, %c0_1] : memref<9x256xf32, #tpu.memory_space<vmem>>, vector<1x256xf32>
    %c2 = arith.constant 2 : index
    %c0_2 = arith.constant 0 : index
    %2 = vector.load %arg2[%c2, %c0_2] : memref<9x256xf32, #tpu.memory_space<vmem>>, vector<1x256xf32>
    %c3 = arith.constant 3 : index
    %c0_3 = arith.constant 0 : index
    %3 = vector.load %arg2[%c3, %c0_3] : memref<9x256xf32, #tpu.memory_space<vmem>>, vector<1x256xf32>
    %c5 = arith.constant 5 : index
    %c0_4 = arith.constant 0 : index
    %4 = vector.load %arg2[%c5, %c0_4] : memref<9x256xf32, #tpu.memory_space<vmem>>, vector<1x256xf32>
    %c6 = arith.constant 6 : index
    %c0_5 = arith.constant 0 : index
    %5 = vector.load %arg2[%c6, %c0_5] : memref<9x256xf32, #tpu.memory_space<vmem>>, vector<1x256xf32>
    %c7 = arith.constant 7 : index
    %c0_6 = arith.constant 0 : index
    %6 = vector.load %arg2[%c7, %c0_6] : memref<9x256xf32, #tpu.memory_space<vmem>>, vector<1x256xf32>
    %c8 = arith.constant 8 : index
    %c0_7 = arith.constant 0 : index
    %7 = vector.load %arg2[%c8, %c0_7] : memref<9x256xf32, #tpu.memory_space<vmem>>, vector<1x256xf32>
    %c0_8 = arith.constant 0 : index
    %c2_9 = arith.constant 2 : index
    %c0_10 = arith.constant 0 : index
    %8 = vector.load %arg1[%c0_8, %c2_9, %c0_10] : memref<1x4x256xf32, #tpu.memory_space<vmem>>, vector<1x1x256xf32>
    %9 = vector.shape_cast %8 : vector<1x1x256xf32> to vector<1x256xf32>
    %c0_11 = arith.constant 0 : index
    %c3_12 = arith.constant 3 : index
    %c0_13 = arith.constant 0 : index
    %10 = vector.load %arg1[%c0_11, %c3_12, %c0_13] : memref<1x4x256xf32, #tpu.memory_space<vmem>>, vector<1x1x256xf32>
    %11 = vector.shape_cast %10 : vector<1x1x256xf32> to vector<1x256xf32>
    %c0_14 = arith.constant 0 : index
    %c0_15 = arith.constant 0 : index
    %12 = memref.load %arg3[%c0_14, %c0_15] : memref<2x15xf32, #tpu.memory_space<smem>>
    %13 = vector.broadcast %12 : f32 to vector<1x256xf32>
    %14 = arith.mulf %9, %13 : vector<1x256xf32>
    %c0_16 = arith.constant 0 : index
    %c1_17 = arith.constant 1 : index
    %15 = memref.load %arg3[%c0_16, %c1_17] : memref<2x15xf32, #tpu.memory_space<smem>>
    %16 = vector.broadcast %15 : f32 to vector<1x256xf32>
    %17 = arith.mulf %11, %16 : vector<1x256xf32>
    %18 = arith.addf %14, %17 : vector<1x256xf32>
    %c0_18 = arith.constant 0 : index
    %c13 = arith.constant 13 : index
    %19 = memref.load %arg3[%c0_18, %c13] : memref<2x15xf32, #tpu.memory_space<smem>>
    %20 = vector.broadcast %19 : f32 to vector<1x256xf32>
    %21 = arith.addf %18, %20 : vector<1x256xf32>
    %cst = arith.constant 0.000000e+00 : f32
    %22 = vector.broadcast %cst : f32 to vector<1x256xf32>
    %23 = arith.maximumf %21, %22 : vector<1x256xf32>
    %c1_19 = arith.constant 1 : index
    %c0_20 = arith.constant 0 : index
    %24 = memref.load %arg3[%c1_19, %c0_20] : memref<2x15xf32, #tpu.memory_space<smem>>
    %25 = vector.broadcast %24 : f32 to vector<1x256xf32>
    %26 = arith.mulf %9, %25 : vector<1x256xf32>
    %c1_21 = arith.constant 1 : index
    %c1_22 = arith.constant 1 : index
    %27 = memref.load %arg3[%c1_21, %c1_22] : memref<2x15xf32, #tpu.memory_space<smem>>
    %28 = vector.broadcast %27 : f32 to vector<1x256xf32>
    %29 = arith.mulf %11, %28 : vector<1x256xf32>
    %30 = arith.addf %26, %29 : vector<1x256xf32>
    %c1_23 = arith.constant 1 : index
    %c13_24 = arith.constant 13 : index
    %31 = memref.load %arg3[%c1_23, %c13_24] : memref<2x15xf32, #tpu.memory_space<smem>>
    %32 = vector.broadcast %31 : f32 to vector<1x256xf32>
    %33 = arith.addf %30, %32 : vector<1x256xf32>
    %cst_25 = arith.constant 0.000000e+00 : f32
    %34 = vector.broadcast %cst_25 : f32 to vector<1x256xf32>
    %35 = arith.maximumf %33, %34 : vector<1x256xf32>
    %c0_26 = arith.constant 0 : index
    %c8_27 = arith.constant 8 : index
    %36 = memref.load %arg3[%c0_26, %c8_27] : memref<2x15xf32, #tpu.memory_space<smem>>
    %37 = vector.broadcast %36 : f32 to vector<1x256xf32>
    %38 = arith.mulf %23, %37 : vector<1x256xf32>
    %c17_i32 = arith.constant 17 : i32
    %39 = tpu.dynamic_rotate %23 by %c17_i32 dim 1 : vector<1x256xf32>, i32 -> vector<1x256xf32>
    %40 = arith.mulf %39, %0 : vector<1x256xf32>
    %c0_28 = arith.constant 0 : index
    %c4 = arith.constant 4 : index
    %41 = memref.load %arg3[%c0_28, %c4] : memref<2x15xf32, #tpu.memory_space<smem>>
    %42 = vector.broadcast %41 : f32 to vector<1x256xf32>
    %43 = arith.mulf %40, %42 : vector<1x256xf32>
    %44 = arith.addf %38, %43 : vector<1x256xf32>
    %c16_i32 = arith.constant 16 : i32
    %45 = tpu.dynamic_rotate %23 by %c16_i32 dim 1 : vector<1x256xf32>, i32 -> vector<1x256xf32>
    %46 = arith.mulf %45, %1 : vector<1x256xf32>
    %c0_29 = arith.constant 0 : index
    %c5_30 = arith.constant 5 : index
    %47 = memref.load %arg3[%c0_29, %c5_30] : memref<2x15xf32, #tpu.memory_space<smem>>
    %48 = vector.broadcast %47 : f32 to vector<1x256xf32>
    %49 = arith.mulf %46, %48 : vector<1x256xf32>
    %50 = arith.addf %44, %49 : vector<1x256xf32>
    %c15_i32 = arith.constant 15 : i32
    %51 = tpu.dynamic_rotate %23 by %c15_i32 dim 1 : vector<1x256xf32>, i32 -> vector<1x256xf32>
    %52 = arith.mulf %51, %2 : vector<1x256xf32>
    %c0_31 = arith.constant 0 : index
    %c6_32 = arith.constant 6 : index
    %53 = memref.load %arg3[%c0_31, %c6_32] : memref<2x15xf32, #tpu.memory_space<smem>>
    %54 = vector.broadcast %53 : f32 to vector<1x256xf32>
    %55 = arith.mulf %52, %54 : vector<1x256xf32>
    %56 = arith.addf %50, %55 : vector<1x256xf32>
    %c1_i32 = arith.constant 1 : i32
    %57 = tpu.dynamic_rotate %23 by %c1_i32 dim 1 : vector<1x256xf32>, i32 -> vector<1x256xf32>
    %58 = arith.mulf %57, %3 : vector<1x256xf32>
    %c0_33 = arith.constant 0 : index
    %c7_34 = arith.constant 7 : index
    %59 = memref.load %arg3[%c0_33, %c7_34] : memref<2x15xf32, #tpu.memory_space<smem>>
    %60 = vector.broadcast %59 : f32 to vector<1x256xf32>
    %61 = arith.mulf %58, %60 : vector<1x256xf32>
    %62 = arith.addf %56, %61 : vector<1x256xf32>
    %c255_i32 = arith.constant 255 : i32
    %63 = tpu.dynamic_rotate %23 by %c255_i32 dim 1 : vector<1x256xf32>, i32 -> vector<1x256xf32>
    %64 = arith.mulf %63, %4 : vector<1x256xf32>
    %c0_35 = arith.constant 0 : index
    %c9 = arith.constant 9 : index
    %65 = memref.load %arg3[%c0_35, %c9] : memref<2x15xf32, #tpu.memory_space<smem>>
    %66 = vector.broadcast %65 : f32 to vector<1x256xf32>
    %67 = arith.mulf %64, %66 : vector<1x256xf32>
    %68 = arith.addf %62, %67 : vector<1x256xf32>
    %c241_i32 = arith.constant 241 : i32
    %69 = tpu.dynamic_rotate %23 by %c241_i32 dim 1 : vector<1x256xf32>, i32 -> vector<1x256xf32>
    %70 = arith.mulf %69, %5 : vector<1x256xf32>
    %c0_36 = arith.constant 0 : index
    %c10 = arith.constant 10 : index
    %71 = memref.load %arg3[%c0_36, %c10] : memref<2x15xf32, #tpu.memory_space<smem>>
    %72 = vector.broadcast %71 : f32 to vector<1x256xf32>
    %73 = arith.mulf %70, %72 : vector<1x256xf32>
    %74 = arith.addf %68, %73 : vector<1x256xf32>
    %c240_i32 = arith.constant 240 : i32
    %75 = tpu.dynamic_rotate %23 by %c240_i32 dim 1 : vector<1x256xf32>, i32 -> vector<1x256xf32>
    %76 = arith.mulf %75, %6 : vector<1x256xf32>
    %c0_37 = arith.constant 0 : index
    %c11 = arith.constant 11 : index
    %77 = memref.load %arg3[%c0_37, %c11] : memref<2x15xf32, #tpu.memory_space<smem>>
    %78 = vector.broadcast %77 : f32 to vector<1x256xf32>
    %79 = arith.mulf %76, %78 : vector<1x256xf32>
    %80 = arith.addf %74, %79 : vector<1x256xf32>
    %c239_i32 = arith.constant 239 : i32
    %81 = tpu.dynamic_rotate %23 by %c239_i32 dim 1 : vector<1x256xf32>, i32 -> vector<1x256xf32>
    %82 = arith.mulf %81, %7 : vector<1x256xf32>
    %c0_38 = arith.constant 0 : index
    %c12 = arith.constant 12 : index
    %83 = memref.load %arg3[%c0_38, %c12] : memref<2x15xf32, #tpu.memory_space<smem>>
    %84 = vector.broadcast %83 : f32 to vector<1x256xf32>
    %85 = arith.mulf %82, %84 : vector<1x256xf32>
    %86 = arith.addf %80, %85 : vector<1x256xf32>
    %c1_39 = arith.constant 1 : index
    %c8_40 = arith.constant 8 : index
    %87 = memref.load %arg3[%c1_39, %c8_40] : memref<2x15xf32, #tpu.memory_space<smem>>
    %88 = vector.broadcast %87 : f32 to vector<1x256xf32>
    %89 = arith.mulf %35, %88 : vector<1x256xf32>
    %c17_i32_41 = arith.constant 17 : i32
    %90 = tpu.dynamic_rotate %35 by %c17_i32_41 dim 1 : vector<1x256xf32>, i32 -> vector<1x256xf32>
    %91 = arith.mulf %90, %0 : vector<1x256xf32>
    %c1_42 = arith.constant 1 : index
    %c4_43 = arith.constant 4 : index
    %92 = memref.load %arg3[%c1_42, %c4_43] : memref<2x15xf32, #tpu.memory_space<smem>>
    %93 = vector.broadcast %92 : f32 to vector<1x256xf32>
    %94 = arith.mulf %91, %93 : vector<1x256xf32>
    %95 = arith.addf %89, %94 : vector<1x256xf32>
    %c16_i32_44 = arith.constant 16 : i32
    %96 = tpu.dynamic_rotate %35 by %c16_i32_44 dim 1 : vector<1x256xf32>, i32 -> vector<1x256xf32>
    %97 = arith.mulf %96, %1 : vector<1x256xf32>
    %c1_45 = arith.constant 1 : index
    %c5_46 = arith.constant 5 : index
    %98 = memref.load %arg3[%c1_45, %c5_46] : memref<2x15xf32, #tpu.memory_space<smem>>
    %99 = vector.broadcast %98 : f32 to vector<1x256xf32>
    %100 = arith.mulf %97, %99 : vector<1x256xf32>
    %101 = arith.addf %95, %100 : vector<1x256xf32>
    %c15_i32_47 = arith.constant 15 : i32
    %102 = tpu.dynamic_rotate %35 by %c15_i32_47 dim 1 : vector<1x256xf32>, i32 -> vector<1x256xf32>
    %103 = arith.mulf %102, %2 : vector<1x256xf32>
    %c1_48 = arith.constant 1 : index
    %c6_49 = arith.constant 6 : index
    %104 = memref.load %arg3[%c1_48, %c6_49] : memref<2x15xf32, #tpu.memory_space<smem>>
    %105 = vector.broadcast %104 : f32 to vector<1x256xf32>
    %106 = arith.mulf %103, %105 : vector<1x256xf32>
    %107 = arith.addf %101, %106 : vector<1x256xf32>
    %c1_i32_50 = arith.constant 1 : i32
    %108 = tpu.dynamic_rotate %35 by %c1_i32_50 dim 1 : vector<1x256xf32>, i32 -> vector<1x256xf32>
    %109 = arith.mulf %108, %3 : vector<1x256xf32>
    %c1_51 = arith.constant 1 : index
    %c7_52 = arith.constant 7 : index
    %110 = memref.load %arg3[%c1_51, %c7_52] : memref<2x15xf32, #tpu.memory_space<smem>>
    %111 = vector.broadcast %110 : f32 to vector<1x256xf32>
    %112 = arith.mulf %109, %111 : vector<1x256xf32>
    %113 = arith.addf %107, %112 : vector<1x256xf32>
    %c255_i32_53 = arith.constant 255 : i32
    %114 = tpu.dynamic_rotate %35 by %c255_i32_53 dim 1 : vector<1x256xf32>, i32 -> vector<1x256xf32>
    %115 = arith.mulf %114, %4 : vector<1x256xf32>
    %c1_54 = arith.constant 1 : index
    %c9_55 = arith.constant 9 : index
    %116 = memref.load %arg3[%c1_54, %c9_55] : memref<2x15xf32, #tpu.memory_space<smem>>
    %117 = vector.broadcast %116 : f32 to vector<1x256xf32>
    %118 = arith.mulf %115, %117 : vector<1x256xf32>
    %119 = arith.addf %113, %118 : vector<1x256xf32>
    %c241_i32_56 = arith.constant 241 : i32
    %120 = tpu.dynamic_rotate %35 by %c241_i32_56 dim 1 : vector<1x256xf32>, i32 -> vector<1x256xf32>
    %121 = arith.mulf %120, %5 : vector<1x256xf32>
    %c1_57 = arith.constant 1 : index
    %c10_58 = arith.constant 10 : index
    %122 = memref.load %arg3[%c1_57, %c10_58] : memref<2x15xf32, #tpu.memory_space<smem>>
    %123 = vector.broadcast %122 : f32 to vector<1x256xf32>
    %124 = arith.mulf %121, %123 : vector<1x256xf32>
    %125 = arith.addf %119, %124 : vector<1x256xf32>
    %c240_i32_59 = arith.constant 240 : i32
    %126 = tpu.dynamic_rotate %35 by %c240_i32_59 dim 1 : vector<1x256xf32>, i32 -> vector<1x256xf32>
    %127 = arith.mulf %126, %6 : vector<1x256xf32>
    %c1_60 = arith.constant 1 : index
    %c11_61 = arith.constant 11 : index
    %128 = memref.load %arg3[%c1_60, %c11_61] : memref<2x15xf32, #tpu.memory_space<smem>>
    %129 = vector.broadcast %128 : f32 to vector<1x256xf32>
    %130 = arith.mulf %127, %129 : vector<1x256xf32>
    %131 = arith.addf %125, %130 : vector<1x256xf32>
    %c239_i32_62 = arith.constant 239 : i32
    %132 = tpu.dynamic_rotate %35 by %c239_i32_62 dim 1 : vector<1x256xf32>, i32 -> vector<1x256xf32>
    %133 = arith.mulf %132, %7 : vector<1x256xf32>
    %c1_63 = arith.constant 1 : index
    %c12_64 = arith.constant 12 : index
    %134 = memref.load %arg3[%c1_63, %c12_64] : memref<2x15xf32, #tpu.memory_space<smem>>
    %135 = vector.broadcast %134 : f32 to vector<1x256xf32>
    %136 = arith.mulf %133, %135 : vector<1x256xf32>
    %137 = arith.addf %131, %136 : vector<1x256xf32>
    %c0_65 = arith.constant 0 : index
    %c2_66 = arith.constant 2 : index
    %138 = memref.load %arg3[%c0_65, %c2_66] : memref<2x15xf32, #tpu.memory_space<smem>>
    %139 = vector.broadcast %138 : f32 to vector<1x256xf32>
    %140 = arith.mulf %86, %139 : vector<1x256xf32>
    %c0_67 = arith.constant 0 : index
    %c3_68 = arith.constant 3 : index
    %141 = memref.load %arg3[%c0_67, %c3_68] : memref<2x15xf32, #tpu.memory_space<smem>>
    %142 = vector.broadcast %141 : f32 to vector<1x256xf32>
    %143 = arith.mulf %137, %142 : vector<1x256xf32>
    %144 = arith.addf %140, %143 : vector<1x256xf32>
    %c0_69 = arith.constant 0 : index
    %c14 = arith.constant 14 : index
    %145 = memref.load %arg3[%c0_69, %c14] : memref<2x15xf32, #tpu.memory_space<smem>>
    %146 = vector.broadcast %145 : f32 to vector<1x256xf32>
    %147 = arith.addf %144, %146 : vector<1x256xf32>
    %cst_70 = arith.constant 0.000000e+00 : f32
    %148 = vector.broadcast %cst_70 : f32 to vector<1x256xf32>
    %149 = arith.maximumf %147, %148 : vector<1x256xf32>
    %c0_71 = arith.constant 0 : index
    %c0_72 = arith.constant 0 : index
    %c0_73 = arith.constant 0 : index
    %150 = vector.load %arg1[%c0_71, %c0_72, %c0_73] : memref<1x4x256xf32, #tpu.memory_space<vmem>>, vector<1x1x256xf32>
    %151 = vector.shape_cast %150 : vector<1x1x256xf32> to vector<1x256xf32>
    %c0_74 = arith.constant 0 : index
    %c0_75 = arith.constant 0 : index
    %c0_76 = arith.constant 0 : index
    %152 = vector.load %arg4[%c0_74, %c0_75, %c0_76] : memref<1x4x256xf32, #tpu.memory_space<vmem>>, vector<1x1x256xf32>
    %153 = vector.shape_cast %152 : vector<1x1x256xf32> to vector<1x256xf32>
    %154 = vector.shape_cast %151 : vector<1x256xf32> to vector<1x1x256xf32>
    tpu.vector_store %arg4[%c0_74, %c0_75, %c0_76], %154 {strides = array<i32>} : memref<1x4x256xf32, #tpu.memory_space<vmem>>, vector<1x1x256xf32>,
    %c0_77 = arith.constant 0 : index
    %c1_78 = arith.constant 1 : index
    %c0_79 = arith.constant 0 : index
    %155 = vector.load %arg4[%c0_77, %c1_78, %c0_79] : memref<1x4x256xf32, #tpu.memory_space<vmem>>, vector<1x1x256xf32>
    %156 = vector.shape_cast %155 : vector<1x1x256xf32> to vector<1x256xf32>
    %157 = vector.shape_cast %149 : vector<1x256xf32> to vector<1x1x256xf32>
    tpu.vector_store %arg4[%c0_77, %c1_78, %c0_79], %157 {strides = array<i32>} : memref<1x4x256xf32, #tpu.memory_space<vmem>>, vector<1x1x256xf32>,
    %c1_80 = arith.constant 1 : index
    %c2_81 = arith.constant 2 : index
    %158 = memref.load %arg3[%c1_80, %c2_81] : memref<2x15xf32, #tpu.memory_space<smem>>
    %159 = vector.broadcast %158 : f32 to vector<1x256xf32>
    %160 = arith.mulf %86, %159 : vector<1x256xf32>
    %c1_82 = arith.constant 1 : index
    %c3_83 = arith.constant 3 : index
    %161 = memref.load %arg3[%c1_82, %c3_83] : memref<2x15xf32, #tpu.memory_space<smem>>
    %162 = vector.broadcast %161 : f32 to vector<1x256xf32>
    %163 = arith.mulf %137, %162 : vector<1x256xf32>
    %164 = arith.addf %160, %163 : vector<1x256xf32>
    %c1_84 = arith.constant 1 : index
    %c14_85 = arith.constant 14 : index
    %165 = memref.load %arg3[%c1_84, %c14_85] : memref<2x15xf32, #tpu.memory_space<smem>>
    %166 = vector.broadcast %165 : f32 to vector<1x256xf32>
    %167 = arith.addf %164, %166 : vector<1x256xf32>
    %cst_86 = arith.constant 0.000000e+00 : f32
    %168 = vector.broadcast %cst_86 : f32 to vector<1x256xf32>
    %169 = arith.maximumf %167, %168 : vector<1x256xf32>
    %c0_87 = arith.constant 0 : index
    %c1_88 = arith.constant 1 : index
    %c0_89 = arith.constant 0 : index
    %170 = vector.load %arg1[%c0_87, %c1_88, %c0_89] : memref<1x4x256xf32, #tpu.memory_space<vmem>>, vector<1x1x256xf32>
    %171 = vector.shape_cast %170 : vector<1x1x256xf32> to vector<1x256xf32>
    %c0_90 = arith.constant 0 : index
    %c2_91 = arith.constant 2 : index
    %c0_92 = arith.constant 0 : index
    %172 = vector.load %arg4[%c0_90, %c2_91, %c0_92] : memref<1x4x256xf32, #tpu.memory_space<vmem>>, vector<1x1x256xf32>
    %173 = vector.shape_cast %172 : vector<1x1x256xf32> to vector<1x256xf32>
    %174 = vector.shape_cast %171 : vector<1x256xf32> to vector<1x1x256xf32>
    tpu.vector_store %arg4[%c0_90, %c2_91, %c0_92], %174 {strides = array<i32>} : memref<1x4x256xf32, #tpu.memory_space<vmem>>, vector<1x1x256xf32>,
    %c0_93 = arith.constant 0 : index
    %c3_94 = arith.constant 3 : index
    %c0_95 = arith.constant 0 : index
    %175 = vector.load %arg4[%c0_93, %c3_94, %c0_95] : memref<1x4x256xf32, #tpu.memory_space<vmem>>, vector<1x1x256xf32>
    %176 = vector.shape_cast %175 : vector<1x1x256xf32> to vector<1x256xf32>
    %177 = vector.shape_cast %169 : vector<1x256xf32> to vector<1x1x256xf32>
    tpu.vector_store %arg4[%c0_93, %c3_94, %c0_95], %177 {strides = array<i32>} : memref<1x4x256xf32, #tpu.memory_space<vmem>>, vector<1x1x256xf32>,
    return
  }
  func.func @transform_0(%arg0: i32) -> (i32, i32, i32) {
    %c0_i32 = arith.constant 0 : i32
    %c0_i32_0 = arith.constant 0 : i32
    %c0_i32_1 = arith.constant 0 : i32
    return %arg0, %c0_i32, %c0_i32_0 : i32, i32, i32
  }
  func.func @transform_1(%arg0: i32) -> (i32, i32) {
    %c0_i32 = arith.constant 0 : i32
    %c0_i32_0 = arith.constant 0 : i32
    %c0_i32_1 = arith.constant 0 : i32
    return %c0_i32, %c0_i32_0 : i32, i32
  }
  func.func @transform_2(%arg0: i32) -> (i32, i32) {
    %c0_i32 = arith.constant 0 : i32
    %c0_i32_0 = arith.constant 0 : i32
    %c0_i32_1 = arith.constant 0 : i32
    return %c0_i32, %c0_i32_0 : i32, i32
  }
  func.func @transform_3(%arg0: i32) -> (i32, i32, i32) {
    %c0_i32 = arith.constant 0 : i32
    %c0_i32_0 = arith.constant 0 : i32
    %c0_i32_1 = arith.constant 0 : i32
    return %arg0, %c0_i32, %c0_i32_0 : i32, i32, i32
  }
}

</mosaic_0001>

<llo_original>
// kernel: tpu_custom_call.1
$region0: #{tpu_custom_call.1}
  #allocation0 [shape = 'u32[]', space=smem, size = 0x4, offset = 0x4, fixed_abs, tag = 'smem constant byte address 0x4 - core index']
  #allocation1 [shape = 'u32[144,128]{1,0:T(1,128)}', space=vmem, size = 0x12000, scoped, tag = 'internal scratch']
  %s0 = inlined_call_operand.hbm [shape: f32[2,4,256], index: 0, kind: input, shape index: {}]
  %s1 = inlined_call_operand.hbm [shape: f32[9,256], index: 1, kind: input, shape index: {}]
  %s2 = inlined_call_operand.hbm [shape: f32[2,15], index: 2, kind: input, shape index: {}]
  %s3 = inlined_call_operand.hbm [shape: f32[2,4,256], index: 3, kind: output, shape index: {}]
  %s4 = sld [smem:[#allocation0]]
  $region57: #{tpu_custom_call.1} parent=0
    _
  %s6 = ssub.s32 1, %s4
  %s7 = scalar_select 0, %s6, %s4
  $region1: #{tpu_custom_call.1} parent=0
    #allocation2 [shape = 'u8[8192]{0}', space=vmem, size = 0x2000, scoped, tag = 'input window, operand 0']
    #allocation3 [shape = 's32[2]{0}', space=sflag, size = 0x8, scoped, tag = 'scoped memory for tpu_custom_call.1']
    #allocation4 [shape = 's32[2]{0}', space=sflag, size = 0x8, scoped, tag = 'scoped memory for tpu_custom_call.1']
    #allocation5 [shape = 's32[2]{0}', space=sflag, size = 0x8, scoped, tag = 'scoped memory for tpu_custom_call.1']
    #allocation6 [shape = 'u8[16384]{0}', space=vmem, size = 0x4000, scoped, tag = 'input window, operand 1, single buffered']
    #allocation7 [shape = 's32[1]{0}', space=sflag, size = 0x4, scoped, tag = 'scoped memory for tpu_custom_call.1']
    #allocation8 [shape = 'u8[1024]{0}', space=smem, size = 0x400, scoped, tag = 'input window, operand 2, single buffered']
    #allocation9 [shape = 'u8[8192]{0}', space=vmem, size = 0x2000, scoped, tag = 'output window, operand 0']
    %8 = vsyncpa [#allocation3], 0
    %s9 = scalar_lea.sflag [#allocation3], 1
    %10 = vsyncpa %s9, 0
    %11 = vsyncpa [#allocation7], 0
    %12 = vsyncpa [#allocation5], 0
    %13 = vsyncpa [#allocation4], 0
    %s14 = scalar_lea.sflag [#allocation4], 1
    %15 = vsyncpa %s14, 0
    loop: start=0, step=1, limit=4
    $region2: #{tpu_custom_call.1} parent=1 // loop_pre_header
      _
    $region3: #{tpu_custom_call.1} parent=1 // loop_header
      %s17 = sphi 0, %s21
      %p18 = scmp.ge.s32.totalorder %s17, 4
      %s27 = sphi 0, %s29
      %s30 = sphi 0, %s27
      %s31 = sphi 0, %s30
      %s47 = sphi 0, %s31
      %s51 = sphi 0, %s51
      %s53 = sphi 0, %s51
      %s54 = sphi 0, %s53
      %s68 = sphi 0, %s54
      %s72 = sphi 0, %s72
      %s74 = sphi 0, %s72
      %s75 = sphi 0, %s74
      %s89 = sphi 0, %s75
      %s95 = sphi 0, %s97
      %s98 = sphi 0, %s95
      %s99 = sphi 0, %s98
      %s115 = sphi 0, %s99
    $region4: #{tpu_custom_call.1} parent=1 // loop_header_branch
      %20 = sbr.rel (%p18) target = $region8
    $region5: #{tpu_custom_call.1} parent=1 // loop_body
      %s22 = ssub.s32 %s17, 1
      %s23 = ssub.s32 %s17, 2
      %s24 = sadd.s32 %s17, 1
      %s25 = ssub.s32 %s17, %s24
      %p26 = scmp.eq.s32.totalorder %s25, 0
      %s28 = sadd.s32 %s27, 1
      %s29 = scalar_select %p26, %s27, %s28
      %p32 = pneg %p26
      %p33 = scmp.eq.s32.totalorder %s17, 1
      %p34 = por %p32, %p33
      %p35 = scmp.ne.s32.totalorder %s27, %s30
      %p36 = scmp.eq.s32.totalorder %s17, 0
      %p37 = por %p35, %p36
      %p38 = scmp.ne.s32.totalorder %s27, %s30
      %p39 = scmp.eq.s32.totalorder %s22, 1
      %p40 = por %p38, %p39
      %p41 = scmp.ne.s32.totalorder %s30, %s31
      %p42 = scmp.eq.s32.totalorder %s22, 0
      %p43 = por %p41, %p42
      %p44 = scmp.ne.s32.totalorder %s30, %s31
      %p45 = scmp.eq.s32.totalorder %s23, 1
      %p46 = por %p44, %p45
      %p48 = scmp.ne.s32.totalorder %s31, %s47
      %p49 = scmp.eq.s32.totalorder %s23, 0
      %p50 = por %p48, %p49
      %s52 = sadd.s32 %s51, 1
      %p55 = scmp.eq.s32.totalorder %s17, 1
      %p56 = scmp.ne.s32.totalorder %s51, %s53
      %p57 = scmp.eq.s32.totalorder %s17, 0
      %p58 = por %p56, %p57
      %p59 = scmp.ne.s32.totalorder %s51, %s53
      %p60 = scmp.eq.s32.totalorder %s22, 1
      %p61 = por %p59, %p60
      %p62 = scmp.ne.s32.totalorder %s53, %s54
      %p63 = scmp.eq.s32.totalorder %s22, 0
      %p64 = por %p62, %p63
      %p65 = scmp.ne.s32.totalorder %s53, %s54
      %p66 = scmp.eq.s32.totalorder %s23, 1
      %p67 = por %p65, %p66
      %p69 = scmp.ne.s32.totalorder %s54, %s68
      %p70 = scmp.eq.s32.totalorder %s23, 0
      %p71 = por %p69, %p70
      %s73 = sadd.s32 %s72, 1
      %p76 = scmp.eq.s32.totalorder %s17, 1
      %p77 = scmp.ne.s32.totalorder %s72, %s74
      %p78 = scmp.eq.s32.totalorder %s17, 0
      %p79 = por %p77, %p78
      %p80 = scmp.ne.s32.totalorder %s72, %s74
      %p81 = scmp.eq.s32.totalorder %s22, 1
      %p82 = por %p80, %p81
      %p83 = scmp.ne.s32.totalorder %s74, %s75
      %p84 = scmp.eq.s32.totalorder %s22, 0
      %p85 = por %p83, %p84
      %p86 = scmp.ne.s32.totalorder %s74, %s75
      %p87 = scmp.eq.s32.totalorder %s23, 1
      %p88 = por %p86, %p87
      %p90 = scmp.ne.s32.totalorder %s75, %s89
      %p91 = scmp.eq.s32.totalorder %s23, 0
      %p92 = por %p90, %p91
      %s93 = ssub.s32 %s17, %s24
      %p94 = scmp.eq.s32.totalorder %s93, 0
      %s96 = sadd.s32 %s95, 1
      %s97 = scalar_select %p94, %s95, %s96
      %p100 = pneg %p94
      %p101 = scmp.eq.s32.totalorder %s17, 1
      %p102 = por %p100, %p101
      %p103 = scmp.ne.s32.totalorder %s95, %s98
      %p104 = scmp.eq.s32.totalorder %s17, 0
      %p105 = por %p103, %p104
      %p106 = scmp.ne.s32.totalorder %s95, %s98
      %p107 = scmp.eq.s32.totalorder %s22, 1
      %p108 = por %p106, %p107
      %p109 = scmp.ne.s32.totalorder %s98, %s99
      %p110 = scmp.eq.s32.totalorder %s22, 0
      %p111 = por %p109, %p110
      %p112 = scmp.ne.s32.totalorder %s98, %s99
      %p113 = scmp.eq.s32.totalorder %s23, 1
      %p114 = por %p112, %p113
      %p116 = scmp.ne.s32.totalorder %s99, %s115
      %p117 = scmp.eq.s32.totalorder %s23, 0
      %p118 = por %p116, %p117
      %p119 = scmp.le.s32.totalorder 1, %s17
      %p120 = scmp.lt.s32.totalorder %s17, 3
      %p121 = pnand %p119, %p120
      %p122 = pneg %p121
      // Predicated region
      $region9: #{tpu_custom_call.1} parent=5 // pred_check
        _
      $region10: #{tpu_custom_call.1} parent=5 // pred_check_branch
        %124 = sbr.rel (%p121) target = $region12
      $region11: #{tpu_custom_call.1} parent=5 // pred_region
        %s125 = ssub.s32 %s17, 1
        // Predicated region
        $region13: #{tpu_custom_call.1} parent=11 // pred_check
          %p126 = pneg %p64
        $region14: #{tpu_custom_call.1} parent=11 // pred_check_branch
          %128 = sbr.rel (%p126) target = $region16
        $region15: #{tpu_custom_call.1} parent=11 // pred_region
          %s130 = ssub.s32 512, 512
          %131 = vsyncadd [#allocation7], %s130
          %s132 = sshll.u32 [#allocation6], 4
          %s133 = int_to_ptr.vmem [resolvable:$true] %s132
          %138 = dma.hbm_to_vmem [thread:$0]  %s1, 512, %s133, [#allocation7], 256, 256, 16
        $region16: #{tpu_custom_call.1} parent=11 // pred_fallthru
          _
        // Predicated region
        $region17: #{tpu_custom_call.1} parent=11 // pred_check
          %p139 = pneg %p85
        $region18: #{tpu_custom_call.1} parent=11 // pred_check_branch
          %141 = sbr.rel (%p139) target = $region20
        $region19: #{tpu_custom_call.1} parent=11 // pred_region
          %s143 = ssub.s32 32, 32
          %144 = vsyncadd [#allocation5], %s143
          %147 = dma.hbm_to_smem %s2, 32, [#allocation8], [#allocation5]
        $region20: #{tpu_custom_call.1} parent=11 // pred_fallthru
          _
      $region12: #{tpu_custom_call.1} parent=5 // pred_fallthru
        _
      %p148 = scmp.lt.s32.totalorder %s17, 2
      // Predicated region
      $region21: #{tpu_custom_call.1} parent=5 // pred_check
        %p149 = pneg %p148
      $region22: #{tpu_custom_call.1} parent=5 // pred_check_branch
        %151 = sbr.rel (%p149) target = $region24
      $region23: #{tpu_custom_call.1} parent=5 // pred_region
        // Predicated region
        $region25: #{tpu_custom_call.1} parent=23 // pred_check
          %p152 = pneg %p37
        $region26: #{tpu_custom_call.1} parent=23 // pred_check_branch
          %154 = sbr.rel (%p152) target = $region28
        $region27: #{tpu_custom_call.1} parent=23 // pred_region
          %s155 = sand.u32 %s27, 1
          %s156 = scalar_lea.sflag [#allocation3], %s155
          %s157 = sand.u32 %s27, 1
          %s158 = smul.addr %s157, 8
          %s159 = scalar_lea.vmem [#allocation2], %s158
          %s161 = ssub.s32 128, 128
          %162 = vsyncadd %s156, %s161
          %s163 = smul.addr %s17, 2
          %s164 = smul.addr %s163, 64
          %s165 = scalar_lea.hbm %s0, %s164
          %s167 = sshll.u32 %s159, 4
          %s168 = int_to_ptr.vmem [resolvable:$true] %s167
          %170 = dma.hbm_to_vmem [thread:$0]  %s165, 128, %s168, %s156
        $region28: #{tpu_custom_call.1} parent=23 // pred_fallthru
          _
      $region24: #{tpu_custom_call.1} parent=5 // pred_fallthru
        _
      %p171 = scmp.le.s32.totalorder 1, %s17
      %p172 = scmp.lt.s32.totalorder %s17, 3
      %p173 = pnand %p171, %p172
      %p174 = pneg %p173
      // Predicated region
      $region29: #{tpu_custom_call.1} parent=5 // pred_check
        _
      $region30: #{tpu_custom_call.1} parent=5 // pred_check_branch
        %176 = sbr.rel (%p173) target = $region32
      $region31: #{tpu_custom_call.1} parent=5 // pred_region
        %s177 = ssub.s32 %s17, 1
        %s178 = sand.u32 %s30, 1
        %s179 = scalar_lea.sflag [#allocation3], %s178
        %s180 = sand.u32 %s30, 1
        %s181 = smul.addr %s180, 8
        %s182 = scalar_lea.vmem [#allocation2], %s181
        // Predicated region
        $region33: #{tpu_custom_call.1} parent=31 // pred_check
          %p183 = pneg %p43
        $region34: #{tpu_custom_call.1} parent=31 // pred_check_branch
          %185 = sbr.rel (%p183) target = $region36
        $region35: #{tpu_custom_call.1} parent=31 // pred_region
          %186 = dma.done %s179, 128
        $region36: #{tpu_custom_call.1} parent=31 // pred_fallthru
          _
        // Predicated region
        $region37: #{tpu_custom_call.1} parent=31 // pred_check
          %p187 = pneg %p64
        $region38: #{tpu_custom_call.1} parent=31 // pred_check_branch
          %189 = sbr.rel (%p187) target = $region40
        $region39: #{tpu_custom_call.1} parent=31 // pred_region
          %190 = dma.done [#allocation7], 512
        $region40: #{tpu_custom_call.1} parent=31 // pred_fallthru
          _
        // Predicated region
        $region41: #{tpu_custom_call.1} parent=31 // pred_check
          %p191 = pneg %p85
        $region42: #{tpu_custom_call.1} parent=31 // pred_check_branch
          %193 = sbr.rel (%p191) target = $region44
        $region43: #{tpu_custom_call.1} parent=31 // pred_region
          %194 = dma.done [#allocation5], 32
        $region44: #{tpu_custom_call.1} parent=31 // pred_fallthru
          _
        %195 = sfence
        %s196 = sand.u32 %s30, 1
        %s197 = scalar_lea.sflag [#allocation3], %s196
        %s198 = sand.u32 %s30, 1
        %s199 = smul.addr %s198, 8
        %s200 = scalar_lea.vmem [#allocation2], %s199
        %p201 = pneg %p43
        %p202 = pneg %p40
        %p203 = pneg %p64
        %p204 = pneg %p61
        %p205 = pneg %p85
        %p206 = pneg %p82
        %p207 = pneg %p111
        %p208 = pneg %p108
        %s209 = sand.u32 %s98, 1
        %s210 = scalar_lea.sflag [#allocation4], %s209
        %s211 = sand.u32 %s98, 1
        %s212 = smul.addr %s211, 8
        %s213 = scalar_lea.vmem [#allocation9], %s212
        %v214 = vld [vmem:[#allocation6] ss:$8 sm:$0x3]
        %s215 = scalar_lea.vmem [#allocation6], 1
        %v216 = vld [vmem:[%s215] ss:$8 sm:$0x3]
        %s217 = scalar_lea.vmem [#allocation6], 2
        %v218 = vld [vmem:[%s217] ss:$8 sm:$0x3]
        %s219 = scalar_lea.vmem [#allocation6], 3
        %v220 = vld [vmem:[%s219] ss:$8 sm:$0x3]
        %s221 = scalar_lea.vmem [#allocation6], 5
        %v222 = vld [vmem:[%s221] ss:$8 sm:$0x3]
        %s223 = scalar_lea.vmem [#allocation6], 6
        %v224 = vld [vmem:[%s223] ss:$8 sm:$0x3]
        %s225 = scalar_lea.vmem [#allocation6], 7
        %v226 = vld [vmem:[%s225] ss:$8 sm:$0x3]
        %s227 = scalar_lea.vmem [#allocation6], 16
        %v228 = vld [vmem:[%s227] ss:$8 sm:$0x3]
        %s229 = scalar_lea.vmem %s182, 2 [#allocation2]
        %v230 = vld [vmem:[%s229] ss:$4 sm:$0x3]
        %s231 = scalar_lea.vmem %s182, 3 [#allocation2]
        %v232 = vld [vmem:[%s231] ss:$4 sm:$0x3]
        %s233 = sld [smem:[#allocation8]]
        %v234 = vstv %s233
        %v235 = vmul.f32 %v230, %v234
        %s236 = sld [smem:[#allocation8 + $0x1]]
        %v237 = vstv %s236
        %v238 = vmul.f32 %v232, %v237
        %v239 = vadd.f32 %v235, %v238
        %s240 = sld [smem:[#allocation8 + $0xd]]
        %v241 = vstv %s240
        %v242 = vadd.f32 %v239, %v241
        %v243 = vmax.f32 %v242, 0.0
        %s244 = sld [smem:[#allocation8 + $0x80]]
        %v245 = vstv %s244
        %v246 = vmul.f32 %v230, %v245
        %s247 = sld [smem:[#allocation8 + $0x81]]
        %v248 = vstv %s247
        %v249 = vmul.f32 %v232, %v248
        %v250 = vadd.f32 %v246, %v249
        %s251 = sld [smem:[#allocation8 + $0x8d]]
        %v252 = vstv %s251
        %v253 = vadd.f32 %v250, %v252
        %v254 = vmax.f32 %v253, 0.0
        %s255 = sld [smem:[#allocation8 + $0x8]]
        %v256 = vstv %s255
        %v257 = vmul.f32 %v243, %v256
        %v259 = vlaneseq
        %v260 = vshrl.u32 %v259, 7
        %v261 = vsub.s32 0, %v260
        %v262 = vrot.slane %v243, %v261
        %v263 = vlaneseq
        %v264 = vshrl.u32 %v263, 7
        %v265 = vsub.s32 1, %v264
        %v266 = vrot.slane %v243, %v265
        %269 = vrot.lane.b32.xlu0 %v262, 17
        %v270 = vpop.permute.xlu0 %269
        %271 = vrot.lane.b32.xlu0 %v266, 17
        %v272 = vpop.permute.xlu0 %271
        %v273 = vlaneseq
        %v274 = vand.u32 %v273, 127
        %vm275 = vcmp.lt.s32.totalorder %v274, 17
        %v276 = vsel %vm275, %v270, %v272
        %v277 = vsel %vm275, %v272, %v270
        %v279 = vlaneseq
        %v280 = vshrl.u32 %v279, 7
        %v281 = vsub.s32 0, %v280
        %v282 = vrot.slane %v214, %v281
        %v283 = vlaneseq
        %v284 = vshrl.u32 %v283, 7
        %v285 = vsub.s32 1, %v284
        %v286 = vrot.slane %v214, %v285
        %v289 = vmul.f32 %v277, %v282
        %v290 = vmul.f32 %v276, %v286
        %s291 = sld [smem:[#allocation8 + $0x4]]
        %v292 = vstv %s291
        %v293 = vmul.f32 %v289, %v292
        %v294 = vmul.f32 %v290, %v292
        %v297 = vcombine.low %v293, %v294
        %v299 = vunpack.c.l.s4 1966171168
        %v300 = vunpack.c.0.s8 %v299
        %v301 = vlaneseq
        %v302 = vshrl.u32 %v301, 7
        %v303 = vsub.s32 %v300, %v302
        %v304 = vrot.slane %v297, %v303
        %v306 = vunpack.c.l.s4 1966171168
        %v307 = vunpack.c.0.s8 %v306
        %v308 = vlaneseq
        %v309 = vshrl.u32 %v308, 7
        %v310 = vsub.s32 %v307, %v309
        %v311 = vrot.slane %v304, %v310
        %v313 = vadd.f32 %v257, %v311
        %314 = vrot.lane.b32.xlu0 %v262, 16
        %v315 = vpop.permute.xlu0 %314
        %316 = vrot.lane.b32.xlu0 %v266, 16
        %v317 = vpop.permute.xlu0 %316
        %vm318 = vcmp.lt.s32.totalorder %v274, 16
        %v319 = vsel %vm318, %v315, %v317
        %v320 = vsel %vm318, %v317, %v315
        %v322 = vlaneseq
        %v323 = vshrl.u32 %v322, 7
        %v324 = vsub.s32 0, %v323
        %v325 = vrot.slane %v216, %v324
        %v326 = vlaneseq
        %v327 = vshrl.u32 %v326, 7
        %v328 = vsub.s32 1, %v327
        %v329 = vrot.slane %v216, %v328
        %v332 = vmul.f32 %v320, %v325
        %v333 = vmul.f32 %v319, %v329
        %s334 = sld [smem:[#allocation8 + $0x5]]
        %v335 = vstv %s334
        %v336 = vmul.f32 %v332, %v335
        %v337 = vmul.f32 %v333, %v335
        %v340 = vcombine.low %v336, %v337
        %v342 = vunpack.c.l.s4 1966171168
        %v343 = vunpack.c.0.s8 %v342
        %v344 = vlaneseq
        %v345 = vshrl.u32 %v344, 7
        %v346 = vsub.s32 %v343, %v345
        %v347 = vrot.slane %v340, %v346
        %v349 = vunpack.c.l.s4 1966171168
        %v350 = vunpack.c.0.s8 %v349
        %v351 = vlaneseq
        %v352 = vshrl.u32 %v351, 7
        %v353 = vsub.s32 %v350, %v352
        %v354 = vrot.slane %v347, %v353
        %v356 = vadd.f32 %v313, %v354
        %357 = vrot.lane.b32.xlu0 %v262, 15
        %v358 = vpop.permute.xlu0 %357
        %359 = vrot.lane.b32.xlu0 %v266, 15
        %v360 = vpop.permute.xlu0 %359
        %vm361 = vcmp.lt.s32.totalorder %v274, 15
        %v362 = vsel %vm361, %v358, %v360
        %v363 = vsel %vm361, %v360, %v358
        %v365 = vlaneseq
        %v366 = vshrl.u32 %v365, 7
        %v367 = vsub.s32 0, %v366
        %v368 = vrot.slane %v218, %v367
        %v369 = vlaneseq
        %v370 = vshrl.u32 %v369, 7
        %v371 = vsub.s32 1, %v370
        %v372 = vrot.slane %v218, %v371
        %v375 = vmul.f32 %v363, %v368
        %v376 = vmul.f32 %v362, %v372
        %s377 = sld [smem:[#allocation8 + $0x6]]
        %v378 = vstv %s377
        %v379 = vmul.f32 %v375, %v378
        %v380 = vmul.f32 %v376, %v378
        %v383 = vcombine.low %v379, %v380
        %v385 = vunpack.c.l.s4 1966171168
        %v386 = vunpack.c.0.s8 %v385
        %v387 = vlaneseq
        %v388 = vshrl.u32 %v387, 7
        %v389 = vsub.s32 %v386, %v388
        %v390 = vrot.slane %v383, %v389
        %v392 = vunpack.c.l.s4 1966171168
        %v393 = vunpack.c.0.s8 %v392
        %v394 = vlaneseq
        %v395 = vshrl.u32 %v394, 7
        %v396 = vsub.s32 %v393, %v395
        %v397 = vrot.slane %v390, %v396
        %v399 = vadd.f32 %v356, %v397
        %400 = vrot.lane.b32.xlu0 %v262, 1
        %v401 = vpop.permute.xlu0 %400
        %402 = vrot.lane.b32.xlu0 %v266, 1
        %v403 = vpop.permute.xlu0 %402
        %vm404 = vcmp.lt.s32.totalorder %v274, 1
        %v405 = vsel %vm404, %v401, %v403
        %v406 = vsel %vm404, %v403, %v401
        %v408 = vlaneseq
        %v409 = vshrl.u32 %v408, 7
        %v410 = vsub.s32 0, %v409
        %v411 = vrot.slane %v220, %v410
        %v412 = vlaneseq
        %v413 = vshrl.u32 %v412, 7
        %v414 = vsub.s32 1, %v413
        %v415 = vrot.slane %v220, %v414
        %v418 = vmul.f32 %v406, %v411
        %v419 = vmul.f32 %v405, %v415
        %s420 = sld [smem:[#allocation8 + $0x7]]
        %v421 = vstv %s420
        %v422 = vmul.f32 %v418, %v421
        %v423 = vmul.f32 %v419, %v421
        %v426 = vcombine.low %v422, %v423
        %v428 = vunpack.c.l.s4 1966171168
        %v429 = vunpack.c.0.s8 %v428
        %v430 = vlaneseq
        %v431 = vshrl.u32 %v430, 7
        %v432 = vsub.s32 %v429, %v431
        %v433 = vrot.slane %v426, %v432
        %v435 = vunpack.c.l.s4 1966171168
        %v436 = vunpack.c.0.s8 %v435
        %v437 = vlaneseq
        %v438 = vshrl.u32 %v437, 7
        %v439 = vsub.s32 %v436, %v438
        %v440 = vrot.slane %v433, %v439
        %v442 = vadd.f32 %v399, %v440
        %443 = vrot.lane.b32.xlu0 %v262, 127
        %v444 = vpop.permute.xlu0 %443
        %445 = vrot.lane.b32.xlu0 %v266, 127
        %v446 = vpop.permute.xlu0 %445
        %vm447 = vcmp.lt.s32.totalorder %v274, 127
        %v448 = vsel %vm447, %v444, %v446
        %v449 = vsel %vm447, %v446, %v444
        %v451 = vlaneseq
        %v452 = vshrl.u32 %v451, 7
        %v453 = vsub.s32 0, %v452
        %v454 = vrot.slane %v222, %v453
        %v455 = vlaneseq
        %v456 = vshrl.u32 %v455, 7
        %v457 = vsub.s32 1, %v456
        %v458 = vrot.slane %v222, %v457
        %v461 = vmul.f32 %v448, %v454
        %v462 = vmul.f32 %v449, %v458
        %s463 = sld [smem:[#allocation8 + $0x9]]
        %v464 = vstv %s463
        %v465 = vmul.f32 %v461, %v464
        %v466 = vmul.f32 %v462, %v464
        %v469 = vcombine.low %v465, %v466
        %v471 = vunpack.c.l.s4 1966171168
        %v472 = vunpack.c.0.s8 %v471
        %v473 = vlaneseq
        %v474 = vshrl.u32 %v473, 7
        %v475 = vsub.s32 %v472, %v474
        %v476 = vrot.slane %v469, %v475
        %v478 = vunpack.c.l.s4 1966171168
        %v479 = vunpack.c.0.s8 %v478
        %v480 = vlaneseq
        %v481 = vshrl.u32 %v480, 7
        %v482 = vsub.s32 %v479, %v481
        %v483 = vrot.slane %v476, %v482
        %v485 = vadd.f32 %v442, %v483
        %486 = vrot.lane.b32.xlu0 %v262, 113
        %v487 = vpop.permute.xlu0 %486
        %488 = vrot.lane.b32.xlu0 %v266, 113
        %v489 = vpop.permute.xlu0 %488
        %vm490 = vcmp.lt.s32.totalorder %v274, 113
        %v491 = vsel %vm490, %v487, %v489
        %v492 = vsel %vm490, %v489, %v487
        %v494 = vlaneseq
        %v495 = vshrl.u32 %v494, 7
        %v496 = vsub.s32 0, %v495
        %v497 = vrot.slane %v224, %v496
        %v498 = vlaneseq
        %v499 = vshrl.u32 %v498, 7
        %v500 = vsub.s32 1, %v499
        %v501 = vrot.slane %v224, %v500
        %v504 = vmul.f32 %v491, %v497
        %v505 = vmul.f32 %v492, %v501
        %s506 = sld [smem:[#allocation8 + $0xa]]
        %v507 = vstv %s506
        %v508 = vmul.f32 %v504, %v507
        %v509 = vmul.f32 %v505, %v507
        %v512 = vcombine.low %v508, %v509
        %v514 = vunpack.c.l.s4 1966171168
        %v515 = vunpack.c.0.s8 %v514
        %v516 = vlaneseq
        %v517 = vshrl.u32 %v516, 7
        %v518 = vsub.s32 %v515, %v517
        %v519 = vrot.slane %v512, %v518
        %v521 = vunpack.c.l.s4 1966171168
        %v522 = vunpack.c.0.s8 %v521
        %v523 = vlaneseq
        %v524 = vshrl.u32 %v523, 7
        %v525 = vsub.s32 %v522, %v524
        %v526 = vrot.slane %v519, %v525
        %v528 = vadd.f32 %v485, %v526
        %529 = vrot.lane.b32.xlu0 %v262, 112
        %v530 = vpop.permute.xlu0 %529
        %531 = vrot.lane.b32.xlu0 %v266, 112
        %v532 = vpop.permute.xlu0 %531
        %vm533 = vcmp.lt.s32.totalorder %v274, 112
        %v534 = vsel %vm533, %v530, %v532
        %v535 = vsel %vm533, %v532, %v530
        %v537 = vlaneseq
        %v538 = vshrl.u32 %v537, 7
        %v539 = vsub.s32 0, %v538
        %v540 = vrot.slane %v226, %v539
        %v541 = vlaneseq
        %v542 = vshrl.u32 %v541, 7
        %v543 = vsub.s32 1, %v542
        %v544 = vrot.slane %v226, %v543
        %v547 = vmul.f32 %v534, %v540
        %v548 = vmul.f32 %v535, %v544
        %s549 = sld [smem:[#allocation8 + $0xb]]
        %v550 = vstv %s549
        %v551 = vmul.f32 %v547, %v550
        %v552 = vmul.f32 %v548, %v550
        %v555 = vcombine.low %v551, %v552
        %v557 = vunpack.c.l.s4 1966171168
        %v558 = vunpack.c.0.s8 %v557
        %v559 = vlaneseq
        %v560 = vshrl.u32 %v559, 7
        %v561 = vsub.s32 %v558, %v560
        %v562 = vrot.slane %v555, %v561
        %v564 = vunpack.c.l.s4 1966171168
        %v565 = vunpack.c.0.s8 %v564
        %v566 = vlaneseq
        %v567 = vshrl.u32 %v566, 7
        %v568 = vsub.s32 %v565, %v567
        %v569 = vrot.slane %v562, %v568
        %v571 = vadd.f32 %v528, %v569
        %572 = vrot.lane.b32.xlu0 %v262, 111
        %v573 = vpop.permute.xlu0 %572
        %574 = vrot.lane.b32.xlu0 %v266, 111
        %v575 = vpop.permute.xlu0 %574
        %vm576 = vcmp.lt.s32.totalorder %v274, 111
        %v577 = vsel %vm576, %v573, %v575
        %v578 = vsel %vm576, %v575, %v573
        %v580 = vlaneseq
        %v581 = vshrl.u32 %v580, 7
        %v582 = vsub.s32 0, %v581
        %v583 = vrot.slane %v228, %v582
        %v584 = vlaneseq
        %v585 = vshrl.u32 %v584, 7
        %v586 = vsub.s32 1, %v585
        %v587 = vrot.slane %v228, %v586
        %v590 = vmul.f32 %v577, %v583
        %v591 = vmul.f32 %v578, %v587
        %s592 = sld [smem:[#allocation8 + $0xc]]
        %v593 = vstv %s592
        %v594 = vmul.f32 %v590, %v593
        %v595 = vmul.f32 %v591, %v593
        %v598 = vcombine.low %v594, %v595
        %v600 = vunpack.c.l.s4 1966171168
        %v601 = vunpack.c.0.s8 %v600
        %v602 = vlaneseq
        %v603 = vshrl.u32 %v602, 7
        %v604 = vsub.s32 %v601, %v603
        %v605 = vrot.slane %v598, %v604
        %v607 = vunpack.c.l.s4 1966171168
        %v608 = vunpack.c.0.s8 %v607
        %v609 = vlaneseq
        %v610 = vshrl.u32 %v609, 7
        %v611 = vsub.s32 %v608, %v610
        %v612 = vrot.slane %v605, %v611
        %v614 = vadd.f32 %v571, %v612
        %s615 = sld [smem:[#allocation8 + $0x88]]
        %v616 = vstv %s615
        %v617 = vmul.f32 %v254, %v616
        %v619 = vlaneseq
        %v620 = vshrl.u32 %v619, 7
        %v621 = vsub.s32 0, %v620
        %v622 = vrot.slane %v254, %v621
        %v623 = vlaneseq
        %v624 = vshrl.u32 %v623, 7
        %v625 = vsub.s32 1, %v624
        %v626 = vrot.slane %v254, %v625
        %629 = vrot.lane.b32.xlu0 %v622, 17
        %v630 = vpop.permute.xlu0 %629
        %631 = vrot.lane.b32.xlu0 %v626, 17
        %v632 = vpop.permute.xlu0 %631
        %v633 = vsel %vm275, %v630, %v632
        %v634 = vsel %vm275, %v632, %v630
        %v635 = vmul.f32 %v634, %v282
        %v636 = vmul.f32 %v633, %v286
        %s637 = sld [smem:[#allocation8 + $0x84]]
        %v638 = vstv %s637
        %v639 = vmul.f32 %v635, %v638
        %v640 = vmul.f32 %v636, %v638
        %v643 = vcombine.low %v639, %v640
        %v645 = vunpack.c.l.s4 1966171168
        %v646 = vunpack.c.0.s8 %v645
        %v647 = vlaneseq
        %v648 = vshrl.u32 %v647, 7
        %v649 = vsub.s32 %v646, %v648
        %v650 = vrot.slane %v643, %v649
        %v652 = vunpack.c.l.s4 1966171168
        %v653 = vunpack.c.0.s8 %v652
        %v654 = vlaneseq
        %v655 = vshrl.u32 %v654, 7
        %v656 = vsub.s32 %v653, %v655
        %v657 = vrot.slane %v650, %v656
        %v659 = vadd.f32 %v617, %v657
        %660 = vrot.lane.b32.xlu0 %v622, 16
        %v661 = vpop.permute.xlu0 %660
        %662 = vrot.lane.b32.xlu0 %v626, 16
        %v663 = vpop.permute.xlu0 %662
        %v664 = vsel %vm318, %v661, %v663
        %v665 = vsel %vm318, %v663, %v661
        %v666 = vmul.f32 %v665, %v325
        %v667 = vmul.f32 %v664, %v329
        %s668 = sld [smem:[#allocation8 + $0x85]]
        %v669 = vstv %s668
        %v670 = vmul.f32 %v666, %v669
        %v671 = vmul.f32 %v667, %v669
        %v674 = vcombine.low %v670, %v671
        %v676 = vunpack.c.l.s4 1966171168
        %v677 = vunpack.c.0.s8 %v676
        %v678 = vlaneseq
        %v679 = vshrl.u32 %v678, 7
        %v680 = vsub.s32 %v677, %v679
        %v681 = vrot.slane %v674, %v680
        %v683 = vunpack.c.l.s4 1966171168
        %v684 = vunpack.c.0.s8 %v683
        %v685 = vlaneseq
        %v686 = vshrl.u32 %v685, 7
        %v687 = vsub.s32 %v684, %v686
        %v688 = vrot.slane %v681, %v687
        %v690 = vadd.f32 %v659, %v688
        %691 = vrot.lane.b32.xlu0 %v622, 15
        %v692 = vpop.permute.xlu0 %691
        %693 = vrot.lane.b32.xlu0 %v626, 15
        %v694 = vpop.permute.xlu0 %693
        %v695 = vsel %vm361, %v692, %v694
        %v696 = vsel %vm361, %v694, %v692
        %v697 = vmul.f32 %v696, %v368
        %v698 = vmul.f32 %v695, %v372
        %s699 = sld [smem:[#allocation8 + $0x86]]
        %v700 = vstv %s699
        %v701 = vmul.f32 %v697, %v700
        %v702 = vmul.f32 %v698, %v700
        %v705 = vcombine.low %v701, %v702
        %v707 = vunpack.c.l.s4 1966171168
        %v708 = vunpack.c.0.s8 %v707
        %v709 = vlaneseq
        %v710 = vshrl.u32 %v709, 7
        %v711 = vsub.s32 %v708, %v710
        %v712 = vrot.slane %v705, %v711
        %v714 = vunpack.c.l.s4 1966171168
        %v715 = vunpack.c.0.s8 %v714
        %v716 = vlaneseq
        %v717 = vshrl.u32 %v716, 7
        %v718 = vsub.s32 %v715, %v717
        %v719 = vrot.slane %v712, %v718
        %v721 = vadd.f32 %v690, %v719
        %722 = vrot.lane.b32.xlu0 %v622, 1
        %v723 = vpop.permute.xlu0 %722
        %724 = vrot.lane.b32.xlu0 %v626, 1
        %v725 = vpop.permute.xlu0 %724
        %v726 = vsel %vm404, %v723, %v725
        %v727 = vsel %vm404, %v725, %v723
        %v728 = vmul.f32 %v727, %v411
        %v729 = vmul.f32 %v726, %v415
        %s730 = sld [smem:[#allocation8 + $0x87]]
        %v731 = vstv %s730
        %v732 = vmul.f32 %v728, %v731
        %v733 = vmul.f32 %v729, %v731
        %v736 = vcombine.low %v732, %v733
        %v738 = vunpack.c.l.s4 1966171168
        %v739 = vunpack.c.0.s8 %v738
        %v740 = vlaneseq
        %v741 = vshrl.u32 %v740, 7
        %v742 = vsub.s32 %v739, %v741
        %v743 = vrot.slane %v736, %v742
        %v745 = vunpack.c.l.s4 1966171168
        %v746 = vunpack.c.0.s8 %v745
        %v747 = vlaneseq
        %v748 = vshrl.u32 %v747, 7
        %v749 = vsub.s32 %v746, %v748
        %v750 = vrot.slane %v743, %v749
        %v752 = vadd.f32 %v721, %v750
        %753 = vrot.lane.b32.xlu0 %v622, 127
        %v754 = vpop.permute.xlu0 %753
        %755 = vrot.lane.b32.xlu0 %v626, 127
        %v756 = vpop.permute.xlu0 %755
        %v757 = vsel %vm447, %v754, %v756
        %v758 = vsel %vm447, %v756, %v754
        %v759 = vmul.f32 %v757, %v454
        %v760 = vmul.f32 %v758, %v458
        %s761 = sld [smem:[#allocation8 + $0x89]]
        %v762 = vstv %s761
        %v763 = vmul.f32 %v759, %v762
        %v764 = vmul.f32 %v760, %v762
        %v767 = vcombine.low %v763, %v764
        %v769 = vunpack.c.l.s4 1966171168
        %v770 = vunpack.c.0.s8 %v769
        %v771 = vlaneseq
        %v772 = vshrl.u32 %v771, 7
        %v773 = vsub.s32 %v770, %v772
        %v774 = vrot.slane %v767, %v773
        %v776 = vunpack.c.l.s4 1966171168
        %v777 = vunpack.c.0.s8 %v776
        %v778 = vlaneseq
        %v779 = vshrl.u32 %v778, 7
        %v780 = vsub.s32 %v777, %v779
        %v781 = vrot.slane %v774, %v780
        %v783 = vadd.f32 %v752, %v781
        %784 = vrot.lane.b32.xlu0 %v622, 113
        %v785 = vpop.permute.xlu0 %784
        %786 = vrot.lane.b32.xlu0 %v626, 113
        %v787 = vpop.permute.xlu0 %786
        %v788 = vsel %vm490, %v785, %v787
        %v789 = vsel %vm490, %v787, %v785
        %v790 = vmul.f32 %v788, %v497
        %v791 = vmul.f32 %v789, %v501
        %s792 = sld [smem:[#allocation8 + $0x8a]]
        %v793 = vstv %s792
        %v794 = vmul.f32 %v790, %v793
        %v795 = vmul.f32 %v791, %v793
        %v798 = vcombine.low %v794, %v795
        %v800 = vunpack.c.l.s4 1966171168
        %v801 = vunpack.c.0.s8 %v800
        %v802 = vlaneseq
        %v803 = vshrl.u32 %v802, 7
        %v804 = vsub.s32 %v801, %v803
        %v805 = vrot.slane %v798, %v804
        %v807 = vunpack.c.l.s4 1966171168
        %v808 = vunpack.c.0.s8 %v807
        %v809 = vlaneseq
        %v810 = vshrl.u32 %v809, 7
        %v811 = vsub.s32 %v808, %v810
        %v812 = vrot.slane %v805, %v811
        %v814 = vadd.f32 %v783, %v812
        %815 = vrot.lane.b32.xlu0 %v622, 112
        %v816 = vpop.permute.xlu0 %815
        %817 = vrot.lane.b32.xlu0 %v626, 112
        %v818 = vpop.permute.xlu0 %817
        %v819 = vsel %vm533, %v816, %v818
        %v820 = vsel %vm533, %v818, %v816
        %v821 = vmul.f32 %v819, %v540
        %v822 = vmul.f32 %v820, %v544
        %s823 = sld [smem:[#allocation8 + $0x8b]]
        %v824 = vstv %s823
        %v825 = vmul.f32 %v821, %v824
        %v826 = vmul.f32 %v822, %v824
        %v829 = vcombine.low %v825, %v826
        %v831 = vunpack.c.l.s4 1966171168
        %v832 = vunpack.c.0.s8 %v831
        %v833 = vlaneseq
        %v834 = vshrl.u32 %v833, 7
        %v835 = vsub.s32 %v832, %v834
        %v836 = vrot.slane %v829, %v835
        %v838 = vunpack.c.l.s4 1966171168
        %v839 = vunpack.c.0.s8 %v838
        %v840 = vlaneseq
        %v841 = vshrl.u32 %v840, 7
        %v842 = vsub.s32 %v839, %v841
        %v843 = vrot.slane %v836, %v842
        %v845 = vadd.f32 %v814, %v843
        %846 = vrot.lane.b32.xlu0 %v622, 111
        %v847 = vpop.permute.xlu0 %846
        %848 = vrot.lane.b32.xlu0 %v626, 111
        %v849 = vpop.permute.xlu0 %848
        %v850 = vsel %vm576, %v847, %v849
        %v851 = vsel %vm576, %v849, %v847
        %v852 = vmul.f32 %v850, %v583
        %v853 = vmul.f32 %v851, %v587
        %s854 = sld [smem:[#allocation8 + $0x8c]]
        %v855 = vstv %s854
        %v856 = vmul.f32 %v852, %v855
        %v857 = vmul.f32 %v853, %v855
        %v860 = vcombine.low %v856, %v857
        %v862 = vunpack.c.l.s4 1966171168
        %v863 = vunpack.c.0.s8 %v862
        %v864 = vlaneseq
        %v865 = vshrl.u32 %v864, 7
        %v866 = vsub.s32 %v863, %v865
        %v867 = vrot.slane %v860, %v866
        %v869 = vunpack.c.l.s4 1966171168
        %v870 = vunpack.c.0.s8 %v869
        %v871 = vlaneseq
        %v872 = vshrl.u32 %v871, 7
        %v873 = vsub.s32 %v870, %v872
        %v874 = vrot.slane %v867, %v873
        %v876 = vadd.f32 %v845, %v874
        %s877 = sld [smem:[#allocation8 + $0x2]]
        %v878 = vstv %s877
        %v879 = vmul.f32 %v614, %v878
        %s880 = sld [smem:[#allocation8 + $0x3]]
        %v881 = vstv %s880
        %v882 = vmul.f32 %v876, %v881
        %v883 = vadd.f32 %v879, %v882
        %s884 = sld [smem:[#allocation8 + $0xe]]
        %v885 = vstv %s884
        %v886 = vadd.f32 %v883, %v885
        %v887 = vmax.f32 %v886, 0.0
        %v888 = vld [vmem:[%s182] ss:$4 sm:$0x3]
        %v889 = vlaneseq
        %vm890 = vcmp.ge.s32.totalorder %v889, 0
        %vm891 = vcmp.lt.s32.totalorder %v889, 256
        %vm892 = vmand %vm890, %vm891
        %893 = vst.msk [vmem:[%s213] ss:$4 sm:$0x3] %vm892, %v888
        %s894 = scalar_lea.vmem %s213, 1 [#allocation9]
        %895 = vst.msk [vmem:[%s894] ss:$4 sm:$0x3] %vm892, %v887
        %s896 = sld [smem:[#allocation8 + $0x82]]
        %v897 = vstv %s896
        %v898 = vmul.f32 %v614, %v897
        %s899 = sld [smem:[#allocation8 + $0x83]]
        %v900 = vstv %s899
        %v901 = vmul.f32 %v876, %v900
        %v902 = vadd.f32 %v898, %v901
        %s903 = sld [smem:[#allocation8 + $0x8e]]
        %v904 = vstv %s903
        %v905 = vadd.f32 %v902, %v904
        %v906 = vmax.f32 %v905, 0.0
        %s907 = scalar_lea.vmem %s182, 1 [#allocation2]
        %v908 = vld [vmem:[%s907] ss:$4 sm:$0x3]
        %s909 = scalar_lea.vmem %s213, 2 [#allocation9]
        %910 = vst.msk [vmem:[%s909] ss:$4 sm:$0x3] %vm892, %v908
        %s911 = scalar_lea.vmem %s213, 3 [#allocation9]
        %912 = vst.msk [vmem:[%s911] ss:$4 sm:$0x3] %vm892, %v906
        %s913 = sand.u32 %s98, 1
        %s914 = scalar_lea.sflag [#allocation4], %s913
        %s915 = sand.u32 %s98, 1
        %s916 = smul.addr %s915, 8
        %s917 = scalar_lea.vmem [#allocation9], %s916
        // Predicated region
        $region45: #{tpu_custom_call.1} parent=31 // pred_check
          %p918 = pneg %p108
        $region46: #{tpu_custom_call.1} parent=31 // pred_check_branch
          %920 = sbr.rel (%p918) target = $region48
        $region47: #{tpu_custom_call.1} parent=31 // pred_region
          %s922 = ssub.s32 128, 128
          %923 = vsyncadd %s914, %s922
          %s924 = smul.addr %s22, 2
          %s925 = smul.addr %s924, 64
          %s926 = scalar_lea.hbm %s3, %s925
          %s928 = sshll.u32 %s917, 4
          %s929 = int_to_ptr.vmem [resolvable:$true] %s928
          %931 = dma.vmem_to_hbm [thread:$0]  %s929, 128, %s926, %s914
        $region48: #{tpu_custom_call.1} parent=31 // pred_fallthru
          _
      $region32: #{tpu_custom_call.1} parent=5 // pred_fallthru
        _
      %p932 = scmp.le.s32.totalorder 2, %s17
      // Predicated region
      $region49: #{tpu_custom_call.1} parent=5 // pred_check
        %p933 = pneg %p932
      $region50: #{tpu_custom_call.1} parent=5 // pred_check_branch
        %935 = sbr.rel (%p933) target = $region52
      $region51: #{tpu_custom_call.1} parent=5 // pred_region
        %s936 = ssub.s32 %s17, 2
        // Predicated region
        $region53: #{tpu_custom_call.1} parent=51 // pred_check
          %p937 = pneg %p114
        $region54: #{tpu_custom_call.1} parent=51 // pred_check_branch
          %939 = sbr.rel (%p937) target = $region56
        $region55: #{tpu_custom_call.1} parent=51 // pred_region
          %s940 = sand.u32 %s99, 1
          %s941 = scalar_lea.sflag [#allocation4], %s940
          %s942 = sand.u32 %s99, 1
          %s943 = smul.addr %s942, 8
          %s944 = scalar_lea.vmem [#allocation9], %s943
          %945 = dma.done %s941, 128
        $region56: #{tpu_custom_call.1} parent=51 // pred_fallthru
          _
      $region52: #{tpu_custom_call.1} parent=5 // pred_fallthru
        _
    $region6: #{tpu_custom_call.1} parent=1 // loop_footer
      %s21 = sadd.s32 1, %s17
    $region7: #{tpu_custom_call.1} parent=1 // loop_footer_branch
      %16 = sbr.rel target = $region3
    $region8: #{tpu_custom_call.1} parent=1 // loop_exit
      _
    %946 = vsyncpa [#allocation3], 1
    %s947 = scalar_lea.sflag [#allocation3], 1
    %948 = vsyncpa %s947, 1
    %949 = vsyncpa [#allocation7], 1
    %950 = vsyncpa [#allocation4], 1
    %s951 = scalar_lea.sflag [#allocation4], 1
    %952 = vsyncpa %s951, 1
    %953 = vsyncpa [#allocation5], 1
    %s954 = scalar_lea.sflag [#allocation5], 1
    %955 = vsyncpa %s954, 1

</llo_original>
